<compile_context>
chip_gen: v7x
topology: tpu7x:2x2x1
jax: 0.10.0
libtpu: 0.0.40
codegen_flags: <defaults>
</compile_context>

<pallas_src>
import functools

import jax
import jax.numpy as jnp
from jax import lax
from jax.experimental import pallas as pl
from jax.experimental.pallas import tpu as pltpu


def _round_up(x, m):
    return (x + m - 1) // m * m


# --------------------- stage 1: encoder MLP + GRU recurrence ------------------

def _encoder_gru_kernel(feat_ref, h0_ref,
                        ew1_ref, eb1_ref, ew2_ref, eb2_ref,
                        wih_ref, bih_ref, whh_ref, bhhn_ref,
                        y_ref, hid_ref, gi_scr, *, T, Bp, H):
    """feat_ref: [T*Bp, f_in] time-major (batch padded to Bp, multiple of 8).

    y_ref   : [T*Bp, H]   GRU outputs (time-major)
    hid_ref : [Bp, H]     final hidden state
    gi_scr  : [T*Bp, 3H]  VMEM scratch for the hoisted GRU input projection
    """
    f32 = jnp.float32
    bf16 = jnp.bfloat16

    # Encoder MLP over all frames at once (bf16 MXU operands, f32 accumulate).
    feat = feat_ref[...].astype(bf16)
    h1 = jnp.maximum(
        jnp.dot(feat, ew1_ref[...], preferred_element_type=f32) + eb1_ref[...], 0.0)
    h2 = jnp.maximum(
        jnp.dot(h1.astype(bf16), ew2_ref[...], preferred_element_type=f32) + eb2_ref[...], 0.0)

    # GRU input projection hoisted out of the recurrence; parked in VMEM so the
    # fori_loop does not hold the whole [T*Bp, 3H] value live in vregs.
    gi_scr[...] = (jnp.dot(h2.astype(bf16), wih_ref[...], preferred_element_type=f32)
                   + bih_ref[...])

    def step(t, h):
        row = pl.multiple_of(t * Bp, 8)
        gi = gi_scr[pl.ds(row, Bp), :]                               # [Bp, 3H] f32
        gh = jnp.dot(h.astype(bf16), whh_ref[...],
                     preferred_element_type=f32)                     # [Bp, 3H] f32
        r = jax.nn.sigmoid(gi[:, 0:H] + gh[:, 0:H])
        z = jax.nn.sigmoid(gi[:, H:2 * H] + gh[:, H:2 * H])
        # b_hh for r/z was folded into b_ih at init; only the n-gate bias must
        # remain inside r * (.) per the PyTorch GRU convention.
        n = jnp.tanh(gi[:, 2 * H:3 * H] + r * (gh[:, 2 * H:3 * H] + bhhn_ref[...]))
        h_new = (1.0 - z) * n + z * h
        y_ref[pl.ds(row, Bp), :] = h_new
        return h_new

    hid_ref[...] = lax.fori_loop(0, T, step, h0_ref[...])


# ---------------- stage 2: decoder + fused PostTranslation (gridded) ----------

def _decoder_pt_kernel(y_ref, bt_ref, dw_ref, db_ref, wpt_ref, pos_ref):
    """y_ref: [rows, H], bt_ref: [rows, J*3], wpt_ref: [Nb*9+J*3, Nv3_pad]."""
    f32 = jnp.float32
    bf16 = jnp.bfloat16
    dec = (jnp.dot(y_ref[...].astype(bf16), dw_ref[...], preferred_element_type=f32)
           + db_ref[...])                                            # [rows, Nb*9]
    x = jnp.concatenate([dec, bt_ref[...]], axis=-1)                 # [rows, Nb*9+J*3]
    pos_ref[...] = jnp.dot(x.astype(bf16), wpt_ref[...], preferred_element_type=f32)


# ------------------------------ helpers --------------------------------------

def transform_simplify(t):
    """4x4 transforms -> flattened 3x3 rotation (j_f_num = 9 features)."""
    return t[..., :3, :3].reshape(*t.shape[:-2], 9)


def _init_linear(key, fan_in, fan_out):
    kw, kb = jax.random.split(key)
    scale = 1.0 / jnp.sqrt(jnp.float32(fan_in))
    w = jax.random.uniform(kw, (fan_in, fan_out), jnp.float32, -scale, scale)
    b = jax.random.uniform(kb, (1, fan_out), jnp.float32, -scale, scale)
    return w, b


class ClothMesh:
    def __init__(self, key, n_vertices, n_loose, n_joints, n_bones):
        kv, kjw, kbw = jax.random.split(key, 3)
        self.vertices = jax.random.normal(kv, (n_vertices, 3), jnp.float32)
        self.loose_v_indices = jnp.arange(4, 4 + n_loose, dtype=jnp.int32)
        self.loose_propotion = jnp.ones((n_loose,), jnp.float32)
        self.joint_indices = jnp.array([0, 2, 3, 5], dtype=jnp.int32)[: min(4, n_joints)]
        self.joint_weights = jax.nn.softmax(
            jax.random.normal(kjw, (n_vertices, n_joints), jnp.float32), axis=-1)
        self.bone_weights = jax.nn.softmax(
            jax.random.normal(kbw, (n_loose, n_bones), jnp.float32), axis=-1)
        self.bone_offset_matrix = jnp.tile(jnp.eye(4, dtype=jnp.float32), (n_bones, 1, 1))


# ------------------------------ model wrapper --------------------------------

class CoarseLooseModelPallas:
    def __init__(self, cloth: ClothMesh, hidden_size=32, seed=42):
        self.cloth = cloth
        self.cloth_v = cloth.vertices[cloth.loose_v_indices]            # [Nv, 3]
        self.joint_indices = cloth.joint_indices
        self.cloth_bone_weights = cloth.bone_weights                    # [Nv, Nb]
        self.cloth_bone_num = cloth.bone_offset_matrix.shape[0]
        self.coarse_hidden_size = hidden_size
        self.j_f_num = 9

        J = int(self.joint_indices.shape[0])
        H = hidden_size
        Nb = self.cloth_bone_num
        Nv = int(self.cloth_v.shape[0])
        f_in = J * self.j_f_num + 3
        self.num_joints = J
        self.num_verts = Nv
        self.f_in = f_in

        key = jax.random.PRNGKey(seed)
        k_e1, k_e2, k_g, k_d = jax.random.split(key, 4)

        # encoder (encode_dim = [J*9+3, H, H]) -- weights stored bf16 for the MXU
        w, b = _init_linear(k_e1, f_in, H)
        self.enc_w1, self.enc_b1 = w.astype(jnp.bfloat16), b
        w, b = _init_linear(k_e2, H, H)
        self.enc_w2, self.enc_b2 = w.astype(jnp.bfloat16), b

        # GRU (input H, hidden H) -- weights pre-transposed to [in, 3H], bf16
        kg1, kg2, kg3, kg4 = jax.random.split(k_g, 4)
        gscale = 1.0 / jnp.sqrt(jnp.float32(H))
        w_ih_t = jax.random.uniform(kg1, (H, 3 * H), jnp.float32, -gscale, gscale)
        w_hh_t = jax.random.uniform(kg2, (H, 3 * H), jnp.float32, -gscale, gscale)
        b_ih = jax.random.uniform(kg3, (1, 3 * H), jnp.float32, -gscale, gscale)
        b_hh = jax.random.uniform(kg4, (1, 3 * H), jnp.float32, -gscale, gscale)
        self.w_ih_t = w_ih_t.astype(jnp.bfloat16)
        self.w_hh_t = w_hh_t.astype(jnp.bfloat16)
        # fold r/z halves of b_hh into b_ih (one less broadcast+add per GRU step)
        self.b_ih_eff = b_ih.at[:, :2 * H].add(b_hh[:, :2 * H])
        self.b_hh_n = b_hh[:, 2 * H:]                                   # [1, H]

        # decoder (decode_dim = [H, cloth_bone_num*9])
        w, b = _init_linear(k_d, H, Nb * 9)
        self.dec_w, self.dec_b = w.astype(jnp.bfloat16), b

        # PostTranslation collapsed into ONE fused constant-weight matmul:
        #   pos[f, v, i] = sum_{b,k} dec[f, b*9 + 3i+k] * bone_w[v,b] * cloth_v[v,k]
        #                + sum_{j}   bt[f, j*3 + i]     * joint_w[v, j]
        self.j_w = cloth.joint_weights[cloth.loose_v_indices][:, self.joint_indices]
        eye3 = jnp.eye(3, dtype=jnp.float32)
        pt_rot = jnp.einsum('vb,vk,ij->bikvj', self.cloth_bone_weights,
                            self.cloth_v, eye3).reshape(Nb * 9, Nv * 3)
        pt_trn = jnp.einsum('vj,ik->jivk', self.j_w, eye3).reshape(J * 3, Nv * 3)
        w_pt = jnp.concatenate([pt_rot, pt_trn], axis=0)                # [Nb*9+J*3, Nv*3]
        self.nv3 = Nv * 3
        self.nv3_pad = _round_up(Nv * 3, 128)                           # lane-dense output
        self.pt_w = jnp.pad(w_pt, ((0, 0), (0, self.nv3_pad - Nv * 3))).astype(jnp.bfloat16)

    def forward(self, body_transforms, hip_trans, in_hidden):
        B, T = body_transforms.shape[:2]
        H = self.coarse_hidden_size
        J = self.num_joints
        Nv = self.num_verts
        Nb = self.cloth_bone_num
        f_in = self.f_in

        # ------------------- data_forward (tiny XLA glue) -------------------
        bt_sel = body_transforms[:, :, self.joint_indices]              # [B,T,J,4,4]
        feat = transform_simplify(bt_sel).reshape(B, T, -1)             # [B,T,J*9]
        feat = jnp.concatenate([feat, hip_trans], axis=-1)              # [B,T,f_in]
        if in_hidden is None:
            in_hidden = jnp.zeros((1, B, H), jnp.float32)

        # Pad batch to a sublane multiple so the GRU loop's dynamic row slices
        # stay 8-aligned. Only small (feature/hidden-width) tensors are
        # reordered here; the big pos tensor is never transposed.
        Bp = _round_up(B, 8)
        feat_tm = jnp.pad(jnp.transpose(feat, (1, 0, 2)),
                          ((0, 0), (0, Bp - B), (0, 0))).reshape(T * Bp, f_in)
        h0_p = jnp.pad(in_hidden[0], ((0, Bp - B), (0, 0)))

        # ---------------- stage 1: encoder + GRU (serial) ----------------
        stage1_inputs = (feat_tm, h0_p,
                         self.enc_w1, self.enc_b1, self.enc_w2, self.enc_b2,
                         self.w_ih_t, self.b_ih_eff, self.w_hh_t, self.b_hh_n)
        y_tm, hid_p = pl.pallas_call(
            functools.partial(_encoder_gru_kernel, T=T, Bp=Bp, H=H),
            out_shape=(jax.ShapeDtypeStruct((T * Bp, H), jnp.float32),
                       jax.ShapeDtypeStruct((Bp, H), jnp.float32)),
            grid=(1,),
            in_specs=[pl.BlockSpec(a.shape, lambda i: (0, 0)) for a in stage1_inputs],
            out_specs=(pl.BlockSpec((T * Bp, H), lambda i: (0, 0)),
                       pl.BlockSpec((Bp, H), lambda i: (0, 0))),
            scratch_shapes=[pltpu.VMEM((T * Bp, 3 * H), jnp.float32)],
            compiler_params=pltpu.CompilerParams(
                dimension_semantics=("arbitrary",),
                vmem_limit_bytes=32 * 1024 * 1024),
        )(*stage1_inputs)

        # ------- stage 2: decoder + PostTranslation, gridded + parallel -------
        # Reorder only the small H-wide GRU output to batch-major so pos comes
        # out batch-major directly (no HBM transpose of the largest tensor).
        y_bm = jnp.transpose(y_tm.reshape(T, Bp, H)[:, :B], (1, 0, 2)).reshape(B * T, H)
        body_translation = bt_sel[..., :3, 3]                           # [B,T,J,3]
        bt_bm = body_translation.reshape(B * T, J * 3)                  # batch-major rows

        BT = B * T
        rt = _round_up(BT, 8)
        row_tile = rt if rt <= 512 else 256
        BTp = _round_up(BT, row_tile)
        y_bm = jnp.pad(y_bm, ((0, BTp - BT), (0, 0)))
        bt_bm = jnp.pad(bt_bm, ((0, BTp - BT), (0, 0)))

        Nb9 = Nb * 9
        Kc = Nb9 + J * 3
        pos_p = pl.pallas_call(
            _decoder_pt_kernel,
            out_shape=jax.ShapeDtypeStruct((BTp, self.nv3_pad), jnp.float32),
            grid=(BTp // row_tile,),
            in_specs=[
                pl.BlockSpec((row_tile, H), lambda i: (i, 0)),
                pl.BlockSpec((row_tile, J * 3), lambda i: (i, 0)),
                pl.BlockSpec((H, Nb9), lambda i: (0, 0)),
                pl.BlockSpec((1, Nb9), lambda i: (0, 0)),
                pl.BlockSpec((Kc, self.nv3_pad), lambda i: (0, 0)),
            ],
            out_specs=pl.BlockSpec((row_tile, self.nv3_pad), lambda i: (i, 0)),
            compiler_params=pltpu.CompilerParams(
                dimension_semantics=("parallel",),
                vmem_limit_bytes=32 * 1024 * 1024),
        )(y_bm, bt_bm, self.dec_w, self.dec_b, self.pt_w)

        pos = pos_p[:BT, :self.nv3].reshape(B, T, Nv, 3)                # batch-major, no transpose
        next_hidden = hid_p[:B][None]                                   # [1,B,H]
        return bt_sel, pos, next_hidden


# ---------------------------------- main -------------------------------------

if __name__ == "__main__":
    B, T = 2, 8
    J_total, Nb, Nv_total, Nloose = 6, 5, 24, 16
    H = 32

    cloth = ClothMesh(jax.random.PRNGKey(1), Nv_total, Nloose, J_total, Nb)
    model = CoarseLooseModelPallas(cloth, hidden_size=H, seed=42)

    k1, k2, k3 = jax.random.split(jax.random.PRNGKey(0), 3)
    body_transforms = jnp.tile(jnp.eye(4, dtype=jnp.float32), (B, T, J_total, 1, 1))
    body_transforms = body_transforms.at[..., :3, :3].add(
        0.1 * jax.random.normal(k1, (B, T, J_total, 3, 3), jnp.float32))
    body_transforms = body_transforms.at[..., :3, 3].set(
        jax.random.normal(k2, (B, T, J_total, 3), jnp.float32))
    hip_trans = jax.random.normal(k3, (B, T, 3), jnp.float32)

    out_bt, out_x, next_hidden = model.forward(body_transforms, hip_trans, None)
    jax.block_until_ready((out_bt, out_x, next_hidden))

    assert out_bt.shape == (B, T, model.num_joints, 4, 4)
    assert out_x.shape == (B, T, Nloose, 3)
    assert next_hidden.shape == (1, B, H)
    print("KERNEL_OK")
</pallas_src>

<mosaic_0001>
module attributes {stable_mosaic.version = 11 : i64} {
  func.func @_encoder_gru_kernel(%arg0: i32, %arg1: memref<64x39xf32, #tpu.memory_space<vmem>>, %arg2: memref<8x32xf32, #tpu.memory_space<vmem>>, %arg3: memref<39x32xbf16, #tpu.memory_space<vmem>>, %arg4: memref<1x32xf32, #tpu.memory_space<vmem>>, %arg5: memref<32x32xbf16, #tpu.memory_space<vmem>>, %arg6: memref<1x32xf32, #tpu.memory_space<vmem>>, %arg7: memref<32x96xbf16, #tpu.memory_space<vmem>>, %arg8: memref<1x96xf32, #tpu.memory_space<vmem>>, %arg9: memref<32x96xbf16, #tpu.memory_space<vmem>>, %arg10: memref<1x32xf32, #tpu.memory_space<vmem>>, %arg11: memref<64x32xf32, #tpu.memory_space<vmem>>, %arg12: memref<8x32xf32, #tpu.memory_space<vmem>>, %arg13: memref<64x96xf32, #tpu.memory_space<vmem>>) attributes {dimension_semantics = [#tpu.dimension_semantics<arbitrary>], iteration_bounds = array<i64: 1>, scalar_prefetch = 0 : i64, scratch_operands = 1 : i64, tpu.core_type = #tpu.core_type<tc>, window_params = [{pipeline_mode = #tpu.pipeline_mode<synchronous>, transform_indices = @transform_0, window_bounds = array<i64: 64, 39>}, {pipeline_mode = #tpu.pipeline_mode<synchronous>, transform_indices = @transform_1, window_bounds = array<i64: 8, 32>}, {pipeline_mode = #tpu.pipeline_mode<synchronous>, transform_indices = @transform_2, window_bounds = array<i64: 39, 32>}, {pipeline_mode = #tpu.pipeline_mode<synchronous>, transform_indices = @transform_3, window_bounds = array<i64: 1, 32>}, {pipeline_mode = #tpu.pipeline_mode<synchronous>, transform_indices = @transform_4, window_bounds = array<i64: 32, 32>}, {pipeline_mode = #tpu.pipeline_mode<synchronous>, transform_indices = @transform_5, window_bounds = array<i64: 1, 32>}, {pipeline_mode = #tpu.pipeline_mode<synchronous>, transform_indices = @transform_6, window_bounds = array<i64: 32, 96>}, {pipeline_mode = #tpu.pipeline_mode<synchronous>, transform_indices = @transform_7, window_bounds = array<i64: 1, 96>}, {pipeline_mode = #tpu.pipeline_mode<synchronous>, transform_indices = @transform_8, window_bounds = array<i64: 32, 96>}, {pipeline_mode = #tpu.pipeline_mode<synchronous>, transform_indices = @transform_9, window_bounds = array<i64: 1, 32>}, {pipeline_mode = #tpu.pipeline_mode<synchronous>, transform_indices = @transform_10, window_bounds = array<i64: 64, 32>}, {pipeline_mode = #tpu.pipeline_mode<synchronous>, transform_indices = @transform_11, window_bounds = array<i64: 8, 32>}]} {
    %c0 = arith.constant 0 : index
    %c0_0 = arith.constant 0 : index
    %0 = vector.load %arg1[%c0, %c0_0] : memref<64x39xf32, #tpu.memory_space<vmem>>, vector<64x39xf32>
    %1 = arith.truncf %0 : vector<64x39xf32> to vector<64x39xbf16>
    %c0_1 = arith.constant 0 : index
    %c0_2 = arith.constant 0 : index
    %2 = vector.load %arg3[%c0_1, %c0_2] : memref<39x32xbf16, #tpu.memory_space<vmem>>, vector<39x32xbf16>
    %cst = arith.constant dense<0.000000e+00> : vector<64x32xf32>
    %3 = tpu.matmul %1, %2, %cst {dimension_numbers = #tpu.dot_dimension_numbers<[1], [0], [0], [1], [0, 0, 1, 1], [], []>} : vector<64x39xbf16>, vector<39x32xbf16>, vector<64x32xf32> -> vector<64x32xf32>
    %c0_3 = arith.constant 0 : index
    %c0_4 = arith.constant 0 : index
    %4 = vector.load %arg4[%c0_3, %c0_4] : memref<1x32xf32, #tpu.memory_space<vmem>>, vector<1x32xf32>
    %5 = vector.broadcast %4 : vector<1x32xf32> to vector<64x32xf32>
    %6 = arith.addf %3, %5 : vector<64x32xf32>
    %cst_5 = arith.constant 0.000000e+00 : f32
    %7 = vector.broadcast %cst_5 : f32 to vector<64x32xf32>
    %8 = arith.maximumf %6, %7 : vector<64x32xf32>
    %9 = arith.truncf %8 : vector<64x32xf32> to vector<64x32xbf16>
    %c0_6 = arith.constant 0 : index
    %c0_7 = arith.constant 0 : index
    %10 = vector.load %arg5[%c0_6, %c0_7] : memref<32x32xbf16, #tpu.memory_space<vmem>>, vector<32x32xbf16>
    %cst_8 = arith.constant dense<0.000000e+00> : vector<64x32xf32>
    %11 = tpu.matmul %9, %10, %cst_8 {dimension_numbers = #tpu.dot_dimension_numbers<[1], [0], [0], [1], [0, 0, 1, 1], [], []>} : vector<64x32xbf16>, vector<32x32xbf16>, vector<64x32xf32> -> vector<64x32xf32>
    %c0_9 = arith.constant 0 : index
    %c0_10 = arith.constant 0 : index
    %12 = vector.load %arg6[%c0_9, %c0_10] : memref<1x32xf32, #tpu.memory_space<vmem>>, vector<1x32xf32>
    %13 = vector.broadcast %12 : vector<1x32xf32> to vector<64x32xf32>
    %14 = arith.addf %11, %13 : vector<64x32xf32>
    %cst_11 = arith.constant 0.000000e+00 : f32
    %15 = vector.broadcast %cst_11 : f32 to vector<64x32xf32>
    %16 = arith.maximumf %14, %15 : vector<64x32xf32>
    %17 = arith.truncf %16 : vector<64x32xf32> to vector<64x32xbf16>
    %c0_12 = arith.constant 0 : index
    %c0_13 = arith.constant 0 : index
    %18 = vector.load %arg7[%c0_12, %c0_13] : memref<32x96xbf16, #tpu.memory_space<vmem>>, vector<32x96xbf16>
    %cst_14 = arith.constant dense<0.000000e+00> : vector<64x96xf32>
    %19 = tpu.matmul %17, %18, %cst_14 {dimension_numbers = #tpu.dot_dimension_numbers<[1], [0], [0], [1], [0, 0, 1, 1], [], []>} : vector<64x32xbf16>, vector<32x96xbf16>, vector<64x96xf32> -> vector<64x96xf32>
    %c0_15 = arith.constant 0 : index
    %c0_16 = arith.constant 0 : index
    %20 = vector.load %arg8[%c0_15, %c0_16] : memref<1x96xf32, #tpu.memory_space<vmem>>, vector<1x96xf32>
    %21 = vector.broadcast %20 : vector<1x96xf32> to vector<64x96xf32>
    %22 = arith.addf %19, %21 : vector<64x96xf32>
    %c0_17 = arith.constant 0 : index
    %c0_18 = arith.constant 0 : index
    %23 = vector.load %arg13[%c0_17, %c0_18] : memref<64x96xf32, #tpu.memory_space<vmem>>, vector<64x96xf32>
    tpu.vector_store %arg13[%c0_17, %c0_18], %22 {strides = array<i32>} : memref<64x96xf32, #tpu.memory_space<vmem>>, vector<64x96xf32>,
    %c0_19 = arith.constant 0 : index
    %c0_20 = arith.constant 0 : index
    %24 = vector.load %arg2[%c0_19, %c0_20] : memref<8x32xf32, #tpu.memory_space<vmem>>, vector<8x32xf32>
    %c0_i32 = arith.constant 0 : i32
    %c8_i32 = arith.constant 8 : i32
    %25 = arith.addi %c0_i32, %c8_i32 : i32
    %c1_i32 = arith.constant 1 : i32
    %26 = scf.for %arg14 = %c0_i32 to %25 step %c1_i32 iter_args(%arg15 = %24) -> (vector<8x32xf32>)  : i32 {
      %c8_i32_24 = arith.constant 8 : i32
      %28 = arith.muli %arg14, %c8_i32_24 : i32
      %29 = tpu.assume_multiple %28, 8 : i32
      %30 = arith.index_cast %29 : i32 to index
      %c0_25 = arith.constant 0 : index
      %31 = vector.load %arg13[%30, %c0_25] : memref<64x96xf32, #tpu.memory_space<vmem>>, vector<8x96xf32>
      %32 = arith.truncf %arg15 : vector<8x32xf32> to vector<8x32xbf16>
      %c0_26 = arith.constant 0 : index
      %c0_27 = arith.constant 0 : index
      %33 = vector.load %arg9[%c0_26, %c0_27] : memref<32x96xbf16, #tpu.memory_space<vmem>>, vector<32x96xbf16>
      %cst_28 = arith.constant dense<0.000000e+00> : vector<8x96xf32>
      %34 = tpu.matmul %32, %33, %cst_28 {dimension_numbers = #tpu.dot_dimension_numbers<[1], [0], [0], [1], [0, 0, 1, 1], [], []>} : vector<8x32xbf16>, vector<32x96xbf16>, vector<8x96xf32> -> vector<8x96xf32>
      %35 = vector.extract_strided_slice %31 {offsets = [0, 0], sizes = [8, 32], strides = [1, 1]} : vector<8x96xf32> to vector<8x32xf32>
      %36 = vector.extract_strided_slice %34 {offsets = [0, 0], sizes = [8, 32], strides = [1, 1]} : vector<8x96xf32> to vector<8x32xf32>
      %37 = arith.addf %35, %36 : vector<8x32xf32>
      %38 = arith.negf %37 : vector<8x32xf32>
      %39 = math.exp %38 : vector<8x32xf32>
      %cst_29 = arith.constant 1.000000e+00 : f32
      %40 = vector.broadcast %cst_29 : f32 to vector<8x32xf32>
      %41 = arith.addf %40, %39 : vector<8x32xf32>
      %42 = arith.divf %40, %41 : vector<8x32xf32>
      %43 = vector.extract_strided_slice %31 {offsets = [0, 32], sizes = [8, 32], strides = [1, 1]} : vector<8x96xf32> to vector<8x32xf32>
      %44 = vector.extract_strided_slice %34 {offsets = [0, 32], sizes = [8, 32], strides = [1, 1]} : vector<8x96xf32> to vector<8x32xf32>
      %45 = arith.addf %43, %44 : vector<8x32xf32>
      %46 = arith.negf %45 : vector<8x32xf32>
      %47 = math.exp %46 : vector<8x32xf32>
      %cst_30 = arith.constant 1.000000e+00 : f32
      %48 = vector.broadcast %cst_30 : f32 to vector<8x32xf32>
      %49 = arith.addf %48, %47 : vector<8x32xf32>
      %50 = arith.divf %48, %49 : vector<8x32xf32>
      %51 = vector.extract_strided_slice %31 {offsets = [0, 64], sizes = [8, 32], strides = [1, 1]} : vector<8x96xf32> to vector<8x32xf32>
      %52 = vector.extract_strided_slice %34 {offsets = [0, 64], sizes = [8, 32], strides = [1, 1]} : vector<8x96xf32> to vector<8x32xf32>
      %c0_31 = arith.constant 0 : index
      %c0_32 = arith.constant 0 : index
      %53 = vector.load %arg10[%c0_31, %c0_32] : memref<1x32xf32, #tpu.memory_space<vmem>>, vector<1x32xf32>
      %54 = vector.broadcast %53 : vector<1x32xf32> to vector<8x32xf32>
      %55 = arith.addf %52, %54 : vector<8x32xf32>
      %56 = arith.mulf %42, %55 : vector<8x32xf32>
      %57 = arith.addf %51, %56 : vector<8x32xf32>
      %58 = math.tanh %57 : vector<8x32xf32>
      %cst_33 = arith.constant 1.000000e+00 : f32
      %59 = vector.broadcast %cst_33 : f32 to vector<8x32xf32>
      %60 = arith.subf %59, %50 : vector<8x32xf32>
      %61 = arith.mulf %60, %58 : vector<8x32xf32>
      %62 = arith.mulf %50, %arg15 : vector<8x32xf32>
      %63 = arith.addf %61, %62 : vector<8x32xf32>
      %64 = arith.index_cast %29 : i32 to index
      %c0_34 = arith.constant 0 : index
      %65 = vector.load %arg11[%64, %c0_34] : memref<64x32xf32, #tpu.memory_space<vmem>>, vector<8x32xf32>
      tpu.vector_store %arg11[%64, %c0_34], %63 {strides = array<i32>} : memref<64x32xf32, #tpu.memory_space<vmem>>, vector<8x32xf32>,
      scf.yield %63 : vector<8x32xf32>
    }
    %c8_i32_21 = arith.constant 8 : i32
    %c0_22 = arith.constant 0 : index
    %c0_23 = arith.constant 0 : index
    %27 = vector.load %arg12[%c0_22, %c0_23] : memref<8x32xf32, #tpu.memory_space<vmem>>, vector<8x32xf32>
    tpu.vector_store %arg12[%c0_22, %c0_23], %26 {strides = array<i32>} : memref<8x32xf32, #tpu.memory_space<vmem>>, vector<8x32xf32>,
    return
  }
  func.func @transform_0(%arg0: i32) -> (i32, i32) {
    %c0_i32 = arith.constant 0 : i32
    %c0_i32_0 = arith.constant 0 : i32
    %c0_i32_1 = arith.constant 0 : i32
    return %c0_i32, %c0_i32_0 : i32, i32
  }
  func.func @transform_1(%arg0: i32) -> (i32, i32) {
    %c0_i32 = arith.constant 0 : i32
    %c0_i32_0 = arith.constant 0 : i32
    %c0_i32_1 = arith.constant 0 : i32
    return %c0_i32, %c0_i32_0 : i32, i32
  }
  func.func @transform_2(%arg0: i32) -> (i32, i32) {
    %c0_i32 = arith.constant 0 : i32
    %c0_i32_0 = arith.constant 0 : i32
    %c0_i32_1 = arith.constant 0 : i32
    return %c0_i32, %c0_i32_0 : i32, i32
  }
  func.func @transform_3(%arg0: i32) -> (i32, i32) {
    %c0_i32 = arith.constant 0 : i32
    %c0_i32_0 = arith.constant 0 : i32
    %c0_i32_1 = arith.constant 0 : i32
    return %c0_i32, %c0_i32_0 : i32, i32
  }
  func.func @transform_4(%arg0: i32) -> (i32, i32) {
    %c0_i32 = arith.constant 0 : i32
    %c0_i32_0 = arith.constant 0 : i32
    %c0_i32_1 = arith.constant 0 : i32
    return %c0_i32, %c0_i32_0 : i32, i32
  }
  func.func @transform_5(%arg0: i32) -> (i32, i32) {
    %c0_i32 = arith.constant 0 : i32
    %c0_i32_0 = arith.constant 0 : i32
    %c0_i32_1 = arith.constant 0 : i32
    return %c0_i32, %c0_i32_0 : i32, i32
  }
  func.func @transform_6(%arg0: i32) -> (i32, i32) {
    %c0_i32 = arith.constant 0 : i32
    %c0_i32_0 = arith.constant 0 : i32
    %c0_i32_1 = arith.constant 0 : i32
    return %c0_i32, %c0_i32_0 : i32, i32
  }
  func.func @transform_7(%arg0: i32) -> (i32, i32) {
    %c0_i32 = arith.constant 0 : i32
    %c0_i32_0 = arith.constant 0 : i32
    %c0_i32_1 = arith.constant 0 : i32
    return %c0_i32, %c0_i32_0 : i32, i32
  }
  func.func @transform_8(%arg0: i32) -> (i32, i32) {
    %c0_i32 = arith.constant 0 : i32
    %c0_i32_0 = arith.constant 0 : i32
    %c0_i32_1 = arith.constant 0 : i32
    return %c0_i32, %c0_i32_0 : i32, i32
  }
  func.func @transform_9(%arg0: i32) -> (i32, i32) {
    %c0_i32 = arith.constant 0 : i32
    %c0_i32_0 = arith.constant 0 : i32
    %c0_i32_1 = arith.constant 0 : i32
    return %c0_i32, %c0_i32_0 : i32, i32
  }
  func.func @transform_10(%arg0: i32) -> (i32, i32) {
    %c0_i32 = arith.constant 0 : i32
    %c0_i32_0 = arith.constant 0 : i32
    %c0_i32_1 = arith.constant 0 : i32
    return %c0_i32, %c0_i32_0 : i32, i32
  }
  func.func @transform_11(%arg0: i32) -> (i32, i32) {
    %c0_i32 = arith.constant 0 : i32
    %c0_i32_0 = arith.constant 0 : i32
    %c0_i32_1 = arith.constant 0 : i32
    return %c0_i32, %c0_i32_0 : i32, i32
  }
}

</mosaic_0001>

<llo_original>
// kernel: tpu_custom_call.1
$region0: #{tpu_custom_call.1}
  #allocation0 [shape = 'u32[]', space=smem, size = 0x4, offset = 0x4, fixed_abs, tag = 'smem constant byte address 0x4 - core index']
  #allocation1 [shape = 'u32[144,128]{1,0:T(1,128)}', space=vmem, size = 0x12000, scoped, tag = 'internal scratch']
  #allocation2 [shape = 'f32[64,96]{1,0:T(8,128)}', space=vmem, size = 0x8000, scoped, tag = 'scratch operand']
  %s0 = inlined_call_operand.vmem [shape: f32[64,39], index: 0, kind: input, shape index: {}]
  %s1 = inlined_call_operand.vmem [shape: f32[8,32], index: 1, kind: input, shape index: {}]
  %s2 = inlined_call_operand.vmem [shape: bf16[39,32], index: 2, kind: input, shape index: {}]
  %s3 = inlined_call_operand.vmem [shape: f32[1,32], index: 3, kind: input, shape index: {}]
  %s4 = inlined_call_operand.vmem [shape: bf16[32,32], index: 4, kind: input, shape index: {}]
  %s5 = inlined_call_operand.vmem [shape: f32[1,32], index: 5, kind: input, shape index: {}]
  %s6 = inlined_call_operand.vmem [shape: bf16[32,96], index: 6, kind: input, shape index: {}]
  %s7 = inlined_call_operand.vmem [shape: f32[1,96], index: 7, kind: input, shape index: {}]
  %s8 = inlined_call_operand.vmem [shape: bf16[32,96], index: 8, kind: input, shape index: {}]
  %s9 = inlined_call_operand.vmem [shape: f32[1,32], index: 9, kind: input, shape index: {}]
  %s10 = inlined_call_operand.vmem [shape: f32[64,32], index: 10, kind: output, shape index: {0}]
  %s11 = inlined_call_operand.hbm [shape: f32[8,32], index: 11, kind: output, shape index: {1}]
  %12 = xla_tuple %s10, %s11
  %s13 = sld [smem:[#allocation0]]
  $region65: #{tpu_custom_call.1} parent=0
    _
  %s15 = ssub.s32 1, %s13
  %s16 = scalar_select 0, %s15, %s13
  $region1: #{tpu_custom_call.1} parent=0
    #allocation3 [shape = 'u8[4096]{0}', space=vmem, size = 0x1000, scoped, tag = 'output window, operand 1, single buffered']
    #allocation4 [shape = 's32[1]{0}', space=sflag, size = 0x4, scoped, tag = 'scoped memory for tpu_custom_call.1']
    %17 = vsyncpa [#allocation4], 0
    // Predicated region
    $region2: #{tpu_custom_call.1} parent=1 // pred_check
      _
    $region3: #{tpu_custom_call.1} parent=1 // pred_check_branch
      %19 = sbr.rel (0) target = $region5
    $region4: #{tpu_custom_call.1} parent=1 // pred_region
      _
    $region5: #{tpu_custom_call.1} parent=1 // pred_fallthru
      _
    // Predicated region
    $region6: #{tpu_custom_call.1} parent=1 // pred_check
      _
    $region7: #{tpu_custom_call.1} parent=1 // pred_check_branch
      %21 = sbr.rel (0) target = $region9
    $region8: #{tpu_custom_call.1} parent=1 // pred_region
      _
    $region9: #{tpu_custom_call.1} parent=1 // pred_fallthru
      _
    // Predicated region
    $region10: #{tpu_custom_call.1} parent=1 // pred_check
      _
    $region11: #{tpu_custom_call.1} parent=1 // pred_check_branch
      %23 = sbr.rel (0) target = $region13
    $region12: #{tpu_custom_call.1} parent=1 // pred_region
      _
    $region13: #{tpu_custom_call.1} parent=1 // pred_fallthru
      _
    // Predicated region
    $region14: #{tpu_custom_call.1} parent=1 // pred_check
      _
    $region15: #{tpu_custom_call.1} parent=1 // pred_check_branch
      %25 = sbr.rel (0) target = $region17
    $region16: #{tpu_custom_call.1} parent=1 // pred_region
      _
    $region17: #{tpu_custom_call.1} parent=1 // pred_fallthru
      _
    // Predicated region
    $region18: #{tpu_custom_call.1} parent=1 // pred_check
      _
    $region19: #{tpu_custom_call.1} parent=1 // pred_check_branch
      %27 = sbr.rel (0) target = $region21
    $region20: #{tpu_custom_call.1} parent=1 // pred_region
      _
    $region21: #{tpu_custom_call.1} parent=1 // pred_fallthru
      _
    // Predicated region
    $region22: #{tpu_custom_call.1} parent=1 // pred_check
      _
    $region23: #{tpu_custom_call.1} parent=1 // pred_check_branch
      %29 = sbr.rel (0) target = $region25
    $region24: #{tpu_custom_call.1} parent=1 // pred_region
      _
    $region25: #{tpu_custom_call.1} parent=1 // pred_fallthru
      _
    // Predicated region
    $region26: #{tpu_custom_call.1} parent=1 // pred_check
      _
    $region27: #{tpu_custom_call.1} parent=1 // pred_check_branch
      %31 = sbr.rel (0) target = $region29
    $region28: #{tpu_custom_call.1} parent=1 // pred_region
      _
    $region29: #{tpu_custom_call.1} parent=1 // pred_fallthru
      _
    // Predicated region
    $region30: #{tpu_custom_call.1} parent=1 // pred_check
      _
    $region31: #{tpu_custom_call.1} parent=1 // pred_check_branch
      %33 = sbr.rel (0) target = $region33
    $region32: #{tpu_custom_call.1} parent=1 // pred_region
      _
    $region33: #{tpu_custom_call.1} parent=1 // pred_fallthru
      _
    // Predicated region
    $region34: #{tpu_custom_call.1} parent=1 // pred_check
      _
    $region35: #{tpu_custom_call.1} parent=1 // pred_check_branch
      %35 = sbr.rel (0) target = $region37
    $region36: #{tpu_custom_call.1} parent=1 // pred_region
      _
    $region37: #{tpu_custom_call.1} parent=1 // pred_fallthru
      _
    // Predicated region
    $region38: #{tpu_custom_call.1} parent=1 // pred_check
      _
    $region39: #{tpu_custom_call.1} parent=1 // pred_check_branch
      %37 = sbr.rel (0) target = $region41
    $region40: #{tpu_custom_call.1} parent=1 // pred_region
      _
    $region41: #{tpu_custom_call.1} parent=1 // pred_fallthru
      _
    %v39 = vld [vmem:[%s0] sm:$0xff]
    %v40 = vld [vmem:[%s0 + $0x8] sm:$0xff]
    %v41 = vld [vmem:[%s0 + $0x10] sm:$0xff]
    %v42 = vld [vmem:[%s0 + $0x18] sm:$0xff]
    %v43 = vld [vmem:[%s0 + $0x20] sm:$0xff]
    %v44 = vld [vmem:[%s0 + $0x28] sm:$0xff]
    %v45 = vld [vmem:[%s0 + $0x30] sm:$0xff]
    %v46 = vld [vmem:[%s0 + $0x38] sm:$0xff]
    %v47 = vpack.c.bf16 %v40, %v39
    %v48 = vpack.c.bf16 %v42, %v41
    %v49 = vpack.c.bf16 %v44, %v43
    %v50 = vpack.c.bf16 %v46, %v45
    %v51 = vld [vmem:[%s2] sm:$0xf]
    %v52 = vld [vmem:[%s2 + $0x4] sm:$0xf]
    %v53 = vld [vmem:[%s2 + $0x8] sm:$0xf]
    %v54 = vld [vmem:[%s2 + $0xc] sm:$0xf]
    %v55 = vld [vmem:[%s2 + $0x10] sm:$0xf]
    %v56 = vld [vmem:[%s3] sm:$0x1]
    %v58 = vlaneseq
    %v59 = vshrl.u32 %v58, 7
    %v60 = vsub.s32 0, %v59
    %v61 = vrot.slane %v56, %v60
    %v68 = vunpack.c.l.b16 %v51
    %v69 = vunpack.c.l.b16 %v52
    %v70 = vunpack.c.l.b16 %v53
    %v71 = vunpack.c.l.b16 %v54
    %v72 = vunpack.c.l.b16 %v55
    %v73 = vpack.c.b16 %v69, %v68
    %v74 = vpack.c.b16 %v71, %v70
    %v75 = vpack.c.b16 %v72, %v72
    %vm78 = vcmask 318464
    %v80 = vsel %vm78, %v47, 0
    %v83 = vsel %vm78, %v48, 0
    %v86 = vsel %vm78, %v49, 0
    %v89 = vsel %vm78, %v50, 0
    %vm91 = vcmask 1042432
    %vm92 = vcmask 1043456
    %v93 = vsel %vm91, 4294967295, 65535
    %v94 = vsel %vm92, %v93, 0
    %v96 = vand.u32 %v75, %v94
    %98 = vmatprep.subr.bf16.mxu0 0
    %99 = vmatpush1.bf16.msra.mxu0 %v73
    %100 = vmatprep.subr.bf16.mxu0 0
    %101 = vmatpush1.bf16.msra.mxu0 %v74
    %102 = vmatprep.subr.bf16.mxu0 0
    %103 = vmatpush1.bf16.msra.mxu0 %v96
    %104 = vmatprep.subr.bf16.mxu0 0
    %105 = vmatpush1.bf16.msra.mxu0 0
    %106 = vmatprep.subr.bf16.mxu0 0
    %107 = vmatpush1.bf16.msra.mxu0 0
    %108 = vmatprep.subr.bf16.mxu0 0
    %109 = vmatpush1.bf16.msra.mxu0 0
    %110 = vmatprep.subr.bf16.mxu0 0
    %111 = vmatpush1.bf16.msra.mxu0 0
    %112 = vmatprep.subr.bf16.mxu0 0
    %113 = vmatpush1.bf16.msra.mxu0 0
    %114 = vmatprep.subr.bf16.mxu0 0
    %115 = vmatpush1.bf16.msra.mxu0 0
    %116 = vmatprep.subr.bf16.mxu0 0
    %117 = vmatpush1.bf16.msra.mxu0 0
    %118 = vmatprep.subr.bf16.mxu0 0
    %119 = vmatpush1.bf16.msra.mxu0 0
    %120 = vmatprep.subr.bf16.mxu0 0
    %121 = vmatpush1.bf16.msra.mxu0 0
    %122 = vmatprep.subr.bf16.mxu0 0
    %123 = vmatpush1.bf16.msra.mxu0 0
    %124 = vmatprep.subr.bf16.mxu0 0
    %125 = vmatpush1.bf16.msra.mxu0 0
    %126 = vmatprep.subr.bf16.mxu0 0
    %127 = vmatpush1.bf16.msra.mxu0 0
    %128 = vmatprep.subr.bf16.mxu0 0
    %129 = vmatpush1.bf16.msra.mxu0 0
    %130 = vmatprep.mubr.bf16.mxu0 0
    %131 = vmatmul.mubr.bf16.gmra.mrb[0].mxu0 %v80
    %v132 = vpop.f32.mrb[0].mxu0
    %v133 = vadd.f32 %v61, %v132
    %v134 = vpop.f32.mrb[0].mxu0
    %v135 = vpop.f32.mrb[0].mxu0
    %v136 = vadd.f32 %v61, %v135
    %v137 = vpop.f32.mrb[0].mxu0
    %138 = vmatprep.mubr.bf16.mxu0 0
    %139 = vmatmul.mubr.bf16.gmra.mrb[0].mxu0 %v83
    %v140 = vpop.f32.mrb[0].mxu0
    %v141 = vadd.f32 %v61, %v140
    %v142 = vpop.f32.mrb[0].mxu0
    %v143 = vpop.f32.mrb[0].mxu0
    %v144 = vadd.f32 %v61, %v143
    %v145 = vpop.f32.mrb[0].mxu0
    %146 = vmatprep.mubr.bf16.mxu0 0
    %147 = vmatmul.mubr.bf16.gmra.mrb[0].mxu0 %v86
    %v148 = vpop.f32.mrb[0].mxu0
    %v149 = vadd.f32 %v61, %v148
    %v150 = vpop.f32.mrb[0].mxu0
    %v151 = vpop.f32.mrb[0].mxu0
    %v152 = vadd.f32 %v61, %v151
    %v153 = vpop.f32.mrb[0].mxu0
    %154 = vmatprep.mubr.bf16.mxu0 0
    %155 = vmatmul.mubr.bf16.gmra.mrb[0].mxu0 %v89
    %v156 = vpop.f32.mrb[0].mxu0
    %v157 = vadd.f32 %v61, %v156
    %v158 = vpop.f32.mrb[0].mxu0
    %v159 = vpop.f32.mrb[0].mxu0
    %v160 = vadd.f32 %v61, %v159
    %v161 = vpop.f32.mrb[0].mxu0
    %162 = vdwg.mxu0
    %v163 = vmax.f32 %v133, 0.0
    %v164 = vmax.f32 %v136, 0.0
    %v165 = vmax.f32 %v141, 0.0
    %v166 = vmax.f32 %v144, 0.0
    %v167 = vmax.f32 %v149, 0.0
    %v168 = vmax.f32 %v152, 0.0
    %v169 = vmax.f32 %v157, 0.0
    %v170 = vmax.f32 %v160, 0.0
    %v171 = vpack.c.bf16 %v164, %v163
    %v172 = vpack.c.bf16 %v166, %v165
    %v173 = vpack.c.bf16 %v168, %v167
    %v174 = vpack.c.bf16 %v170, %v169
    %v175 = vld [vmem:[%s4] sm:$0xf]
    %v176 = vld [vmem:[%s4 + $0x4] sm:$0xf]
    %v177 = vld [vmem:[%s4 + $0x8] sm:$0xf]
    %v178 = vld [vmem:[%s4 + $0xc] sm:$0xf]
    %v179 = vld [vmem:[%s5] sm:$0x1]
    %v181 = vlaneseq
    %v182 = vshrl.u32 %v181, 7
    %v183 = vsub.s32 0, %v182
    %v184 = vrot.slane %v179, %v183
    %v190 = vunpack.c.l.b16 %v175
    %v191 = vunpack.c.l.b16 %v176
    %v192 = vunpack.c.l.b16 %v177
    %v193 = vunpack.c.l.b16 %v178
    %v194 = vpack.c.b16 %v191, %v190
    %v195 = vpack.c.b16 %v193, %v192
    %vm198 = vcmask 261120
    %v200 = vsel %vm198, %v171, 0
    %v203 = vsel %vm198, %v172, 0
    %v206 = vsel %vm198, %v173, 0
    %v209 = vsel %vm198, %v174, 0
    %211 = vmatprep.subr.bf16.mxu0 0
    %212 = vmatpush1.bf16.msra.mxu0 %v194
    %213 = vmatprep.subr.bf16.mxu0 0
    %214 = vmatpush1.bf16.msra.mxu0 %v195
    %215 = vmatprep.subr.bf16.mxu0 0
    %216 = vmatpush1.bf16.msra.mxu0 0
    %217 = vmatprep.subr.bf16.mxu0 0
    %218 = vmatpush1.bf16.msra.mxu0 0
    %219 = vmatprep.subr.bf16.mxu0 0
    %220 = vmatpush1.bf16.msra.mxu0 0
    %221 = vmatprep.subr.bf16.mxu0 0
    %222 = vmatpush1.bf16.msra.mxu0 0
    %223 = vmatprep.subr.bf16.mxu0 0
    %224 = vmatpush1.bf16.msra.mxu0 0
    %225 = vmatprep.subr.bf16.mxu0 0
    %226 = vmatpush1.bf16.msra.mxu0 0
    %227 = vmatprep.subr.bf16.mxu0 0
    %228 = vmatpush1.bf16.msra.mxu0 0
    %229 = vmatprep.subr.bf16.mxu0 0
    %230 = vmatpush1.bf16.msra.mxu0 0
    %231 = vmatprep.subr.bf16.mxu0 0
    %232 = vmatpush1.bf16.msra.mxu0 0
    %233 = vmatprep.subr.bf16.mxu0 0
    %234 = vmatpush1.bf16.msra.mxu0 0
    %235 = vmatprep.subr.bf16.mxu0 0
    %236 = vmatpush1.bf16.msra.mxu0 0
    %237 = vmatprep.subr.bf16.mxu0 0
    %238 = vmatpush1.bf16.msra.mxu0 0
    %239 = vmatprep.subr.bf16.mxu0 0
    %240 = vmatpush1.bf16.msra.mxu0 0
    %241 = vmatprep.subr.bf16.mxu0 0
    %242 = vmatpush1.bf16.msra.mxu0 0
    %243 = vmatprep.mubr.bf16.mxu0 0
    %244 = vmatmul.mubr.bf16.gmra.mrb[0].mxu0 %v200
    %v245 = vpop.f32.mrb[0].mxu0
    %v246 = vadd.f32 %v184, %v245
    %v247 = vpop.f32.mrb[0].mxu0
    %v248 = vpop.f32.mrb[0].mxu0
    %v249 = vadd.f32 %v184, %v248
    %v250 = vpop.f32.mrb[0].mxu0
    %251 = vmatprep.mubr.bf16.mxu0 0
    %252 = vmatmul.mubr.bf16.gmra.mrb[0].mxu0 %v203
    %v253 = vpop.f32.mrb[0].mxu0
    %v254 = vadd.f32 %v184, %v253
    %v255 = vpop.f32.mrb[0].mxu0
    %v256 = vpop.f32.mrb[0].mxu0
    %v257 = vadd.f32 %v184, %v256
    %v258 = vpop.f32.mrb[0].mxu0
    %259 = vmatprep.mubr.bf16.mxu0 0
    %260 = vmatmul.mubr.bf16.gmra.mrb[0].mxu0 %v206
    %v261 = vpop.f32.mrb[0].mxu0
    %v262 = vadd.f32 %v184, %v261
    %v263 = vpop.f32.mrb[0].mxu0
    %v264 = vpop.f32.mrb[0].mxu0
    %v265 = vadd.f32 %v184, %v264
    %v266 = vpop.f32.mrb[0].mxu0
    %267 = vmatprep.mubr.bf16.mxu0 0
    %268 = vmatmul.mubr.bf16.gmra.mrb[0].mxu0 %v209
    %v269 = vpop.f32.mrb[0].mxu0
    %v270 = vadd.f32 %v184, %v269
    %v271 = vpop.f32.mrb[0].mxu0
    %v272 = vpop.f32.mrb[0].mxu0
    %v273 = vadd.f32 %v184, %v272
    %v274 = vpop.f32.mrb[0].mxu0
    %275 = vdwg.mxu0
    %v276 = vmax.f32 %v246, 0.0
    %v277 = vmax.f32 %v249, 0.0
    %v278 = vmax.f32 %v254, 0.0
    %v279 = vmax.f32 %v257, 0.0
    %v280 = vmax.f32 %v262, 0.0
    %v281 = vmax.f32 %v265, 0.0
    %v282 = vmax.f32 %v270, 0.0
    %v283 = vmax.f32 %v273, 0.0
    %v284 = vpack.c.bf16 %v277, %v276
    %v285 = vpack.c.bf16 %v279, %v278
    %v286 = vpack.c.bf16 %v281, %v280
    %v287 = vpack.c.bf16 %v283, %v282
    %v288 = vld [vmem:[%s6] sm:$0xf]
    %v289 = vld [vmem:[%s6 + $0x4] sm:$0xf]
    %v290 = vld [vmem:[%s6 + $0x8] sm:$0xf]
    %v291 = vld [vmem:[%s6 + $0xc] sm:$0xf]
    %v292 = vld [vmem:[%s7] sm:$0x1]
    %v294 = vlaneseq
    %v295 = vshrl.u32 %v294, 7
    %v296 = vsub.s32 0, %v295
    %v297 = vrot.slane %v292, %v296
    %v303 = vunpack.c.l.b16 %v288
    %v304 = vunpack.c.l.b16 %v289
    %v305 = vunpack.c.l.b16 %v290
    %v306 = vunpack.c.l.b16 %v291
    %v307 = vpack.c.b16 %v304, %v303
    %v308 = vpack.c.b16 %v306, %v305
    %v312 = vsel %vm198, %v284, 0
    %v315 = vsel %vm198, %v285, 0
    %v318 = vsel %vm198, %v286, 0
    %v321 = vsel %vm198, %v287, 0
    %323 = vmatprep.subr.bf16.mxu0 0
    %324 = vmatpush1.bf16.msra.mxu0 %v307
    %325 = vmatprep.subr.bf16.mxu0 0
    %326 = vmatpush1.bf16.msra.mxu0 %v308
    %327 = vmatprep.subr.bf16.mxu0 0
    %328 = vmatpush1.bf16.msra.mxu0 0
    %329 = vmatprep.subr.bf16.mxu0 0
    %330 = vmatpush1.bf16.msra.mxu0 0
    %331 = vmatprep.subr.bf16.mxu0 0
    %332 = vmatpush1.bf16.msra.mxu0 0
    %333 = vmatprep.subr.bf16.mxu0 0
    %334 = vmatpush1.bf16.msra.mxu0 0
    %335 = vmatprep.subr.bf16.mxu0 0
    %336 = vmatpush1.bf16.msra.mxu0 0
    %337 = vmatprep.subr.bf16.mxu0 0
    %338 = vmatpush1.bf16.msra.mxu0 0
    %339 = vmatprep.subr.bf16.mxu0 0
    %340 = vmatpush1.bf16.msra.mxu0 0
    %341 = vmatprep.subr.bf16.mxu0 0
    %342 = vmatpush1.bf16.msra.mxu0 0
    %343 = vmatprep.subr.bf16.mxu0 0
    %344 = vmatpush1.bf16.msra.mxu0 0
    %345 = vmatprep.subr.bf16.mxu0 0
    %346 = vmatpush1.bf16.msra.mxu0 0
    %347 = vmatprep.subr.bf16.mxu0 0
    %348 = vmatpush1.bf16.msra.mxu0 0
    %349 = vmatprep.subr.bf16.mxu0 0
    %350 = vmatpush1.bf16.msra.mxu0 0
    %351 = vmatprep.subr.bf16.mxu0 0
    %352 = vmatpush1.bf16.msra.mxu0 0
    %353 = vmatprep.subr.bf16.mxu0 0
    %354 = vmatpush1.bf16.msra.mxu0 0
    %355 = vmatprep.mubr.bf16.mxu0 0
    %356 = vmatmul.mubr.bf16.gmra.mrb[0].mxu0 %v312
    %v357 = vpop.f32.mrb[0].mxu0
    %v358 = vadd.f32 %v297, %v357
    %v359 = vpop.f32.mrb[0].mxu0
    %v360 = vpop.f32.mrb[0].mxu0
    %v361 = vadd.f32 %v297, %v360
    %v362 = vpop.f32.mrb[0].mxu0
    %363 = vmatprep.mubr.bf16.mxu0 0
    %364 = vmatmul.mubr.bf16.gmra.mrb[0].mxu0 %v315
    %v365 = vpop.f32.mrb[0].mxu0
    %v366 = vadd.f32 %v297, %v365
    %v367 = vpop.f32.mrb[0].mxu0
    %v368 = vpop.f32.mrb[0].mxu0
    %v369 = vadd.f32 %v297, %v368
    %v370 = vpop.f32.mrb[0].mxu0
    %371 = vmatprep.mubr.bf16.mxu0 0
    %372 = vmatmul.mubr.bf16.gmra.mrb[0].mxu0 %v318
    %v373 = vpop.f32.mrb[0].mxu0
    %v374 = vadd.f32 %v297, %v373
    %v375 = vpop.f32.mrb[0].mxu0
    %v376 = vpop.f32.mrb[0].mxu0
    %v377 = vadd.f32 %v297, %v376
    %v378 = vpop.f32.mrb[0].mxu0
    %379 = vmatprep.mubr.bf16.mxu0 0
    %380 = vmatmul.mubr.bf16.gmra.mrb[0].mxu0 %v321
    %v381 = vpop.f32.mrb[0].mxu0
    %v382 = vadd.f32 %v297, %v381
    %v383 = vpop.f32.mrb[0].mxu0
    %v384 = vpop.f32.mrb[0].mxu0
    %v385 = vadd.f32 %v297, %v384
    %v386 = vpop.f32.mrb[0].mxu0
    %387 = vdwg.mxu0
    %vm388 = vcmask 785408
    %389 = vst.msk [vmem:[#allocation2] sm:$0xff] %vm388, %v358
    %390 = vst.msk [vmem:[#allocation2 + $0x8] sm:$0xff] %vm388, %v361
    %391 = vst.msk [vmem:[#allocation2 + $0x10] sm:$0xff] %vm388, %v366
    %392 = vst.msk [vmem:[#allocation2 + $0x18] sm:$0xff] %vm388, %v369
    %393 = vst.msk [vmem:[#allocation2 + $0x20] sm:$0xff] %vm388, %v374
    %394 = vst.msk [vmem:[#allocation2 + $0x28] sm:$0xff] %vm388, %v377
    %395 = vst.msk [vmem:[#allocation2 + $0x30] sm:$0xff] %vm388, %v382
    %396 = vst.msk [vmem:[#allocation2 + $0x38] sm:$0xff] %vm388, %v385
    %v397 = vld [vmem:[%s1] sm:$0xff]
    loop: start=0, step=1, limit=8
    $region42: #{tpu_custom_call.1} parent=1 // loop_pre_header
      _
    $region43: #{tpu_custom_call.1} parent=1 // loop_header
      %s399 = sphi 0, %s403
      %p400 = scmp.ge.s32.totalorder %s399, 8
      %v404 = vphi %v397, %v510
    $region44: #{tpu_custom_call.1} parent=1 // loop_header_branch
      %402 = sbr.rel (%p400) target = $region48
    $region45: #{tpu_custom_call.1} parent=1 // loop_body
      %s405 = smul.u32 %s399, 8
      %s406 = scalar_lea.vmem [#allocation2], %s405
      %v407 = vld [vmem:[%s406] sm:$0xff]
      %v408 = vpack.c.bf16 %v404, %v404
      %v409 = vld [vmem:[%s8] sm:$0xf]
      %v410 = vld [vmem:[%s8 + $0x4] sm:$0xf]
      %v411 = vld [vmem:[%s8 + $0x8] sm:$0xf]
      %v412 = vld [vmem:[%s8 + $0xc] sm:$0xf]
      %v417 = vunpack.c.l.b16 %v409
      %v418 = vunpack.c.l.b16 %v410
      %v419 = vunpack.c.l.b16 %v411
      %v420 = vunpack.c.l.b16 %v412
      %v421 = vpack.c.b16 %v418, %v417
      %v422 = vpack.c.b16 %v420, %v419
      %v426 = vsel %vm198, %v408, 0
      %428 = vmatprep.subr.bf16.mxu0 0
      %429 = vmatpush1.bf16.msra.mxu0 %v421
      %430 = vmatprep.subr.bf16.mxu0 0
      %431 = vmatpush1.bf16.msra.mxu0 %v422
      %432 = vmatprep.subr.bf16.mxu0 0
      %433 = vmatpush1.bf16.msra.mxu0 0
      %434 = vmatprep.subr.bf16.mxu0 0
      %435 = vmatpush1.bf16.msra.mxu0 0
      %436 = vmatprep.subr.bf16.mxu0 0
      %437 = vmatpush1.bf16.msra.mxu0 0
      %438 = vmatprep.subr.bf16.mxu0 0
      %439 = vmatpush1.bf16.msra.mxu0 0
      %440 = vmatprep.subr.bf16.mxu0 0
      %441 = vmatpush1.bf16.msra.mxu0 0
      %442 = vmatprep.subr.bf16.mxu0 0
      %443 = vmatpush1.bf16.msra.mxu0 0
      %444 = vmatprep.subr.bf16.mxu0 0
      %445 = vmatpush1.bf16.msra.mxu0 0
      %446 = vmatprep.subr.bf16.mxu0 0
      %447 = vmatpush1.bf16.msra.mxu0 0
      %448 = vmatprep.subr.bf16.mxu0 0
      %449 = vmatpush1.bf16.msra.mxu0 0
      %450 = vmatprep.subr.bf16.mxu0 0
      %451 = vmatpush1.bf16.msra.mxu0 0
      %452 = vmatprep.subr.bf16.mxu0 0
      %453 = vmatpush1.bf16.msra.mxu0 0
      %454 = vmatprep.subr.bf16.mxu0 0
      %455 = vmatpush1.bf16.msra.mxu0 0
      %456 = vmatprep.subr.bf16.mxu0 0
      %457 = vmatpush1.bf16.msra.mxu0 0
      %458 = vmatprep.subr.bf16.mxu0 0
      %459 = vmatpush1.bf16.msra.mxu0 0
      %460 = vmatprep.mubr.bf16.mxu0 0
      %461 = vmatmul.mubr.bf16.gmra.mrb[0].mxu0 %v426
      %v462 = vpop.f32.mrb[0].mxu0
      %v463 = vadd.f32 0.0, %v462
      %v464 = vpop.f32.mrb[0].mxu0
      %v465 = vpop.f32.mrb[0].mxu0
      %v466 = vpop.f32.mrb[0].mxu0
      %467 = vdwg.mxu0
      %v468 = vadd.f32 %v407, %v463
      %v469 = vxor.u32 %v468, 2147483648
      %v470 = vmul.f32 %v469, 1.442695
      %v471 = vpow.pop %v470
      %v472 = vadd.f32 %v471, 1.0
      %v473 = vrcp.pop %v472
      %v474 = vmul.f32 1.0, %v473
      %v475 = vld [vmem:[%s9] sm:$0x1]
      %v477 = vlaneseq
      %v478 = vshrl.u32 %v477, 7
      %v479 = vsub.s32 0, %v478
      %v480 = vrot.slane %v475, %v479
      %481 = vrot.lane.b32.xlu0 %v480, 64
      %v482 = vpop.permute.xlu0 %481
      %v484 = vadd.f32 %v463, %v482
      %486 = vrot.lane.b32.xlu0 %v484, 64
      %v487 = vpop.permute.xlu0 %486
      %v489 = vmul.f32 %v474, %v487
      %491 = vrot.lane.b32.xlu0 %v489, 64
      %v492 = vpop.permute.xlu0 %491
      %v494 = vadd.f32 %v407, %v492
      %v495 = vtanh.pop %v494
      %v496 = vsub.f32 1.0, %v474
      %498 = vrot.lane.b32.xlu0 %v495, 96
      %v499 = vpop.permute.xlu0 %498
      %v501 = vmul.f32 %v496, %v499
      %503 = vrot.lane.b32.xlu0 %v404, 32
      %v504 = vpop.permute.xlu0 %503
      %v506 = vmul.f32 %v474, %v504
      %v507 = vadd.f32 %v501, %v506
      %509 = vrot.lane.b32.xlu0 %v507, 96
      %v510 = vpop.permute.xlu0 %509
      %s512 = scalar_lea.vmem %s10, %s405
      %513 = vst.msk [vmem:[%s512] sm:$0xff] %vm198, %v510
    $region46: #{tpu_custom_call.1} parent=1 // loop_footer
      %s403 = sadd.s32 1, %s399
    $region47: #{tpu_custom_call.1} parent=1 // loop_footer_branch
      %398 = sbr.rel target = $region43
    $region48: #{tpu_custom_call.1} parent=1 // loop_exit
      _
    %514 = vst.msk [vmem:[#allocation3] sm:$0xff] %vm198, %v404
    // Predicated region
    $region49: #{tpu_custom_call.1} parent=1 // pred_check
      _
    $region50: #{tpu_custom_call.1} parent=1 // pred_check_branch
      %516 = sbr.rel (0) target = $region52
    $region51: #{tpu_custom_call.1} parent=1 // pred_region
      _
    $region52: #{tpu_custom_call.1} parent=1 // pred_fallthru
      _
    // Predicated region
    $region53: #{tpu_custom_call.1} parent=1 // pred_check
      _
    $region54: #{tpu_custom_call.1} parent=1 // pred_check_branch
      %518 = sbr.rel (0) target = $region56
    $region55: #{tpu_custom_call.1} parent=1 // pred_region
      %s520 = ssub.s32 128, 128
      %521 = vsyncadd [#allocation4], %s520
      %s523 = sshll.u32 [#allocation3], 4
      %s524 = int_to_ptr.vmem [resolvable:$true] %s523
      %526 = dma.vmem_to_hbm [thread:$0]  %s524, 128, %s11, [#allocation4]
    $region56: #{tpu_custom_call.1} parent=1 // pred_fallthru
      _
    // Predicated region
    $region57: #{tpu_custom_call.1} parent=1 // pred_check
      _
    $region58: #{tpu_custom_call.1} parent=1 // pred_check_branch
      %528 = sbr.rel (0) target = $region60
    $region59: #{tpu_custom_call.1} parent=1 // pred_region
      _
    $region60: #{tpu_custom_call.1} parent=1 // pred_fallthru
      _
    // Predicated region
    $region61: #{tpu_custom_call.1} parent=1 // pred_check
      _
    $region62: #{tpu_custom_call.1} parent=1 // pred_check_branch
      %530 = sbr.rel (0) target = $region64
    $region63: #{tpu_custom_call.1} parent=1 // pred_region
      %531 = dma.done [#allocation4], 128
    $region64: #{tpu_custom_call.1} parent=1 // pred_fallthru
      _
    %532 = vsyncpa [#allocation4], 1

</llo_original>
